<compile_context>
chip_gen: v7x
topology: tpu7x:2x2x1
jax: 0.10.0
libtpu: 0.0.40
codegen_flags: <defaults>
</compile_context>

<pallas_src>
import functools

import jax
import jax.numpy as jnp
from jax import lax
from jax.experimental import pallas as pl
from jax.experimental.pallas import tpu as pltpu


# ----------------------------------------------------------------------------
# Frontend kernel: backbone stand-in (GAP + Linear) fused with the GRU layer-0
# input-to-hidden projection:  gi0 = (GAP(x) @ w_b + b_b) @ wih0 + bih0
# ----------------------------------------------------------------------------
def _frontend_kernel(x_ref, wb_ref, bb_ref, wih0_ref, bih0_ref, gi0_ref):
    # x_ref: (tn, C, HW) f32   wb_ref: (C, F) bf16 (pre-scaled by 1/HW)
    # wih0_ref: (F, 3H) bf16   biases f32.   Output gi0: (tn, 3H) f32.
    pooled = jnp.sum(x_ref[...], axis=-1)                       # (tn, C); 1/HW folded in wb
    feats = (
        jnp.dot(pooled.astype(jnp.bfloat16), wb_ref[...],
                preferred_element_type=jnp.float32)
        + bb_ref[...]
    )                                                           # (tn, F) f32
    gi0_ref[...] = (
        jnp.dot(feats.astype(jnp.bfloat16), wih0_ref[...],
                preferred_element_type=jnp.float32)
        + bih0_ref[...]
    )                                                           # (tn, 3H) f32


def frontend_gi0(frames, wb_bf16, bb, wih0_bf16, bih0, *, tile_n=256):
    N, C, HW = frames.shape
    F = wb_bf16.shape[1]
    H3 = wih0_bf16.shape[1]
    tn = min(tile_n, N)
    return pl.pallas_call(
        _frontend_kernel,
        out_shape=jax.ShapeDtypeStruct((N, H3), jnp.float32),
        grid=(pl.cdiv(N, tn),),
        in_specs=[
            pl.BlockSpec((tn, C, HW), lambda i: (i, 0, 0)),     # per-tile frames
            pl.BlockSpec((C, F), lambda i: (0, 0)),             # backbone weight (bf16)
            pl.BlockSpec((1, F), lambda i: (0, 0)),             # backbone bias
            pl.BlockSpec((F, H3), lambda i: (0, 0)),            # weight_ih_l0 (bf16, transposed)
            pl.BlockSpec((1, H3), lambda i: (0, 0)),            # bias_ih_l0
        ],
        out_specs=pl.BlockSpec((tn, H3), lambda i: (i, 0)),     # lane-dense gi0 tile
        compiler_params=pltpu.CompilerParams(
            dimension_semantics=("parallel",),                  # shards across v7x cores
            vmem_limit_bytes=32 * 1024 * 1024),
    )(frames, wb_bf16, bb, wih0_bf16, bih0)


# ----------------------------------------------------------------------------
# Recurrent kernel: 2-layer GRU (PyTorch gate semantics) over the T*B sequence
# with an in-kernel fori_loop (single grid step), plus final Linear + Sigmoid.
# ----------------------------------------------------------------------------
def _gru_fc_kernel(gi0_ref, whh0_ref, bhh0_ref,
                   wih1_ref, whh1_ref, bih1_ref, bhh1_ref,
                   wfc_ref, bfc_ref, o_ref, *, hidden, seq_len):
    H = hidden
    # Load the grid-invariant weights into values once (bf16; accum stays f32).
    whh0 = whh0_ref[...]
    bhh0 = bhh0_ref[...]
    wih1 = wih1_ref[...]
    whh1 = whh1_ref[...]
    bih1 = bih1_ref[...]
    bhh1 = bhh1_ref[...]

    def gru_update(gi, gh, h):
        # PyTorch GRU gate order (r, z, n); n = tanh(gi_n + r * gh_n).
        r = jax.nn.sigmoid(gi[:, 0 * H:1 * H] + gh[:, 0 * H:1 * H])
        z = jax.nn.sigmoid(gi[:, 1 * H:2 * H] + gh[:, 1 * H:2 * H])
        n = jnp.tanh(gi[:, 2 * H:3 * H] + r * gh[:, 2 * H:3 * H])
        return (1.0 - z) * n + z * h

    def step(t, carry):
        h1, h2 = carry
        gi0 = gi0_ref[pl.ds(t, 1), :]                           # (1, 3H) precomputed ih-proj
        gh0 = jnp.dot(h1.astype(jnp.bfloat16), whh0,
                      preferred_element_type=jnp.float32) + bhh0
        h1n = gru_update(gi0, gh0, h1)
        # nn.GRU(dropout=0.25) between layers is inactive at inference.
        gi1 = jnp.dot(h1n.astype(jnp.bfloat16), wih1,
                      preferred_element_type=jnp.float32) + bih1
        gh1 = jnp.dot(h2.astype(jnp.bfloat16), whh1,
                      preferred_element_type=jnp.float32) + bhh1
        h2n = gru_update(gi1, gh1, h2)
        return h1n, h2n

    h_init = jnp.zeros((1, H), jnp.float32)
    _, h2 = lax.fori_loop(0, seq_len, step, (h_init, h_init))

    # fc: Linear(hidden, 1) + Sigmoid, applied to the last hidden state.
    logit = jnp.sum(h2 * wfc_ref[...], axis=-1, keepdims=True) + bfc_ref[...]
    o_ref[...] = jax.nn.sigmoid(logit)


def gru_fc(gi0, p, hidden):
    L, H3 = gi0.shape
    kernel = functools.partial(_gru_fc_kernel, hidden=hidden, seq_len=L)

    def const2d(shape):
        return pl.BlockSpec(shape, lambda t: (0, 0))

    return pl.pallas_call(
        kernel,
        out_shape=jax.ShapeDtypeStruct((1, 1), jnp.float32),
        grid=(1,),                                              # single step: weights DMA'd once
        in_specs=[
            pl.BlockSpec((L, H3), lambda t: (0, 0)),            # precomputed gi0 (all timesteps)
            const2d((hidden, H3)),                              # weight_hh_l0 (bf16)
            const2d((1, H3)),                                   # bias_hh_l0
            const2d((hidden, H3)),                              # weight_ih_l1 (bf16)
            const2d((hidden, H3)),                              # weight_hh_l1 (bf16)
            const2d((1, H3)),                                   # bias_ih_l1
            const2d((1, H3)),                                   # bias_hh_l1
            const2d((1, hidden)),                               # fc weight (out, in) row
            const2d((1, 1)),                                    # fc bias
        ],
        out_specs=pl.BlockSpec((1, 1), lambda t: (0, 0)),
        compiler_params=pltpu.CompilerParams(
            dimension_semantics=("arbitrary",),                 # sequential recurrence
            vmem_limit_bytes=32 * 1024 * 1024),
    )(gi0, p["whh0"], p["bhh0"],
      p["wih1"], p["whh1"], p["bih1"], p["bhh1"],
      p["wfc"], p["bfc"])


# ----------------------------------------------------------------------------
# Parameter construction (deterministic, in-script) and full forward
# ----------------------------------------------------------------------------
def init_params(key, in_ch, feat_dim, hidden):
    ks = jax.random.split(key, 12)

    def u(k, shape, scale):
        return jax.random.uniform(k, shape, jnp.float32, -scale, scale)

    sc_b = 1.0 / (in_ch ** 0.5)
    sc_h = 1.0 / (hidden ** 0.5)
    H3 = 3 * hidden
    return {
        # backbone stand-in
        "w_b": u(ks[0], (in_ch, feat_dim), sc_b),
        "b_b": u(ks[1], (1, feat_dim), sc_b),
        # GRU layer 0  (weights stored transposed: (in, 3*hidden), gate order r,z,n)
        "wih0": u(ks[2], (feat_dim, H3), sc_h),
        "whh0": u(ks[3], (hidden, H3), sc_h),
        "bih0": u(ks[4], (1, H3), sc_h),
        "bhh0": u(ks[5], (1, H3), sc_h),
        # GRU layer 1
        "wih1": u(ks[6], (hidden, H3), sc_h),
        "whh1": u(ks[7], (hidden, H3), sc_h),
        "bih1": u(ks[8], (1, H3), sc_h),
        "bhh1": u(ks[9], (1, H3), sc_h),
        # fc: Linear(hidden, 1) + Sigmoid  (weight stored as (out, in) row)
        "wfc": u(ks[10], (1, hidden), sc_h),
        "bfc": u(ks[11], (1, 1), sc_h),
    }


def res_gru_forward(x, params, hidden):
    # x: (B, T, C, H, W)  -- matches PyTorch input layout (batch, seq, C, H, W)
    B, T, C, Himg, Wimg = x.shape
    HW = Himg * Wimg
    # x.permute(1,0,2,3,4) -> (T, B, C, H, W); per-frame backbone; cat(dim=0)
    frames = jnp.transpose(x, (1, 0, 2, 3, 4)).reshape(T * B, C, HW)

    # bf16 weight casts (f32 accumulation in-kernel); fold the GAP 1/HW scale into w_b.
    wb_bf16 = (params["w_b"] * (1.0 / HW)).astype(jnp.bfloat16)
    wih0_bf16 = params["wih0"].astype(jnp.bfloat16)
    gi0 = frontend_gi0(frames, wb_bf16, params["b_b"], wih0_bf16, params["bih0"])

    gru_params = {
        "whh0": params["whh0"].astype(jnp.bfloat16),
        "bhh0": params["bhh0"],
        "wih1": params["wih1"].astype(jnp.bfloat16),
        "whh1": params["whh1"].astype(jnp.bfloat16),
        "bih1": params["bih1"],
        "bhh1": params["bhh1"],
        "wfc": params["wfc"],
        "bfc": params["bfc"],
    }
    # features.unsqueeze(0) -> GRU batch=1, seq_len=T*B; return fc(res[:, -1, :])
    return gru_fc(gi0, gru_params, hidden)                      # (1, 1)


if __name__ == "__main__":
    # Small shapes consistent with the module's forward:
    # batch=2, seq=4, channels=4, spatial=16x16; feature dim 256 (stands in for
    # the 1000-d backbone output), hidden 128 (stands in for 1024).
    B, T, C, Himg, Wimg = 2, 4, 4, 16, 16
    FEAT, HID = 256, 128

    key = jax.random.PRNGKey(0)
    kx, kp = jax.random.split(key)
    x = jax.random.normal(kx, (B, T, C, Himg, Wimg), jnp.float32)
    params = init_params(kp, C, FEAT, HID)

    out = jax.block_until_ready(res_gru_forward(x, params, HID))
    assert out.shape == (1, 1)
    assert bool(jnp.all(jnp.isfinite(out)))
    print("KERNEL_OK")
</pallas_src>

<mosaic_0001>
module attributes {stable_mosaic.version = 11 : i64} {
  func.func @_frontend_kernel(%arg0: i32, %arg1: memref<8x4x256xf32, #tpu.memory_space<vmem>>, %arg2: memref<4x256xbf16, #tpu.memory_space<vmem>>, %arg3: memref<1x256xf32, #tpu.memory_space<vmem>>, %arg4: memref<256x384xbf16, #tpu.memory_space<vmem>>, %arg5: memref<1x384xf32, #tpu.memory_space<vmem>>, %arg6: memref<8x384xf32, #tpu.memory_space<vmem>>) attributes {dimension_semantics = [#tpu.dimension_semantics<parallel>], iteration_bounds = array<i64: 1>, scalar_prefetch = 0 : i64, scratch_operands = 0 : i64, tpu.core_type = #tpu.core_type<tc>, window_params = [{transform_indices = @transform_0, window_bounds = array<i64: 8, 4, 256>}, {pipeline_mode = #tpu.pipeline_mode<synchronous>, transform_indices = @transform_1, window_bounds = array<i64: 4, 256>}, {pipeline_mode = #tpu.pipeline_mode<synchronous>, transform_indices = @transform_2, window_bounds = array<i64: 1, 256>}, {pipeline_mode = #tpu.pipeline_mode<synchronous>, transform_indices = @transform_3, window_bounds = array<i64: 256, 384>}, {pipeline_mode = #tpu.pipeline_mode<synchronous>, transform_indices = @transform_4, window_bounds = array<i64: 1, 384>}, {transform_indices = @transform_5, window_bounds = array<i64: 8, 384>}]} {
    %c0 = arith.constant 0 : index
    %c0_0 = arith.constant 0 : index
    %c0_1 = arith.constant 0 : index
    %0 = vector.load %arg1[%c0, %c0_0, %c0_1] : memref<8x4x256xf32, #tpu.memory_space<vmem>>, vector<8x4x256xf32>
    %cst = arith.constant dense<0.000000e+00> : vector<8x4xf32>
    %1 = vector.multi_reduction <add>, %0, %cst [2] : vector<8x4x256xf32> to vector<8x4xf32>
    %2 = arith.truncf %1 : vector<8x4xf32> to vector<8x4xbf16>
    %c0_2 = arith.constant 0 : index
    %c0_3 = arith.constant 0 : index
    %3 = vector.load %arg2[%c0_2, %c0_3] : memref<4x256xbf16, #tpu.memory_space<vmem>>, vector<4x256xbf16>
    %cst_4 = arith.constant dense<0.000000e+00> : vector<8x256xf32>
    %4 = tpu.matmul %2, %3, %cst_4 {dimension_numbers = #tpu.dot_dimension_numbers<[1], [0], [0], [1], [0, 0, 1, 1], [], []>} : vector<8x4xbf16>, vector<4x256xbf16>, vector<8x256xf32> -> vector<8x256xf32>
    %c0_5 = arith.constant 0 : index
    %c0_6 = arith.constant 0 : index
    %5 = vector.load %arg3[%c0_5, %c0_6] : memref<1x256xf32, #tpu.memory_space<vmem>>, vector<1x256xf32>
    %6 = vector.broadcast %5 : vector<1x256xf32> to vector<8x256xf32>
    %7 = arith.addf %4, %6 : vector<8x256xf32>
    %8 = arith.truncf %7 : vector<8x256xf32> to vector<8x256xbf16>
    %c0_7 = arith.constant 0 : index
    %c0_8 = arith.constant 0 : index
    %9 = vector.load %arg4[%c0_7, %c0_8] : memref<256x384xbf16, #tpu.memory_space<vmem>>, vector<256x384xbf16>
    %cst_9 = arith.constant dense<0.000000e+00> : vector<8x384xf32>
    %10 = tpu.matmul %8, %9, %cst_9 {dimension_numbers = #tpu.dot_dimension_numbers<[1], [0], [0], [1], [0, 0, 1, 1], [], []>} : vector<8x256xbf16>, vector<256x384xbf16>, vector<8x384xf32> -> vector<8x384xf32>
    %c0_10 = arith.constant 0 : index
    %c0_11 = arith.constant 0 : index
    %11 = vector.load %arg5[%c0_10, %c0_11] : memref<1x384xf32, #tpu.memory_space<vmem>>, vector<1x384xf32>
    %12 = vector.broadcast %11 : vector<1x384xf32> to vector<8x384xf32>
    %13 = arith.addf %10, %12 : vector<8x384xf32>
    %c0_12 = arith.constant 0 : index
    %c0_13 = arith.constant 0 : index
    %14 = vector.load %arg6[%c0_12, %c0_13] : memref<8x384xf32, #tpu.memory_space<vmem>>, vector<8x384xf32>
    tpu.vector_store %arg6[%c0_12, %c0_13], %13 {strides = array<i32>} : memref<8x384xf32, #tpu.memory_space<vmem>>, vector<8x384xf32>,
    return
  }
  func.func @transform_0(%arg0: i32) -> (i32, i32, i32) {
    %c0_i32 = arith.constant 0 : i32
    %c0_i32_0 = arith.constant 0 : i32
    %c0_i32_1 = arith.constant 0 : i32
    return %arg0, %c0_i32, %c0_i32_0 : i32, i32, i32
  }
  func.func @transform_1(%arg0: i32) -> (i32, i32) {
    %c0_i32 = arith.constant 0 : i32
    %c0_i32_0 = arith.constant 0 : i32
    %c0_i32_1 = arith.constant 0 : i32
    return %c0_i32, %c0_i32_0 : i32, i32
  }
  func.func @transform_2(%arg0: i32) -> (i32, i32) {
    %c0_i32 = arith.constant 0 : i32
    %c0_i32_0 = arith.constant 0 : i32
    %c0_i32_1 = arith.constant 0 : i32
    return %c0_i32, %c0_i32_0 : i32, i32
  }
  func.func @transform_3(%arg0: i32) -> (i32, i32) {
    %c0_i32 = arith.constant 0 : i32
    %c0_i32_0 = arith.constant 0 : i32
    %c0_i32_1 = arith.constant 0 : i32
    return %c0_i32, %c0_i32_0 : i32, i32
  }
  func.func @transform_4(%arg0: i32) -> (i32, i32) {
    %c0_i32 = arith.constant 0 : i32
    %c0_i32_0 = arith.constant 0 : i32
    %c0_i32_1 = arith.constant 0 : i32
    return %c0_i32, %c0_i32_0 : i32, i32
  }
  func.func @transform_5(%arg0: i32) -> (i32, i32) {
    %c0_i32 = arith.constant 0 : i32
    %c0_i32_0 = arith.constant 0 : i32
    return %arg0, %c0_i32 : i32, i32
  }
}

</mosaic_0001>

<llo_original>
// kernel: tpu_custom_call.1
$region0: #{tpu_custom_call.1}
  #allocation0 [shape = 'u32[]', space=smem, size = 0x4, offset = 0x4, fixed_abs, tag = 'smem constant byte address 0x4 - core index']
  #allocation1 [shape = 'u32[144,128]{1,0:T(1,128)}', space=vmem, size = 0x12000, scoped, tag = 'internal scratch']
  %s0 = inlined_call_operand.hbm [shape: f32[8,4,256], index: 0, kind: input, shape index: {}]
  %s1 = inlined_call_operand.hbm [shape: bf16[4,256], index: 1, kind: input, shape index: {}]
  %s2 = inlined_call_operand.vmem [shape: f32[1,256], index: 2, kind: input, shape index: {}]
  %s3 = inlined_call_operand.hbm [shape: bf16[256,384], index: 3, kind: input, shape index: {}]
  %s4 = inlined_call_operand.vmem [shape: f32[1,384], index: 4, kind: input, shape index: {}]
  %s5 = inlined_call_operand.hbm [shape: f32[8,384], index: 5, kind: output, shape index: {}]
  %s6 = sld [smem:[#allocation0]]
  $region42: #{tpu_custom_call.1} parent=0
    _
  %s8 = ssub.s32 1, %s6
  %s9 = scalar_select 0, %s8, %s6
  $region1: #{tpu_custom_call.1} parent=0
    #allocation2 [shape = 'u8[32768]{0}', space=vmem, size = 0x8000, scoped, tag = 'input window, operand 0, single buffered']
    #allocation3 [shape = 's32[1]{0}', space=sflag, size = 0x4, scoped, tag = 'scoped memory for tpu_custom_call.1']
    #allocation4 [shape = 's32[1]{0}', space=sflag, size = 0x4, scoped, tag = 'scoped memory for tpu_custom_call.1']
    #allocation5 [shape = 'u8[2048]{0}', space=vmem, size = 0x800, scoped, tag = 'input window, operand 1, single buffered']
    #allocation6 [shape = 's32[1]{0}', space=sflag, size = 0x4, scoped, tag = 'scoped memory for tpu_custom_call.1']
    #allocation7 [shape = 'u8[196608]{0}', space=vmem, size = 0x30000, scoped, tag = 'input window, operand 3, single buffered']
    #allocation8 [shape = 'u8[12288]{0}', space=vmem, size = 0x3000, scoped, tag = 'output window, operand 0, single buffered']
    %10 = vsyncpa [#allocation3], 0
    %11 = vsyncpa [#allocation6], 0
    %12 = vsyncpa [#allocation4], 0
    // Predicated region
    $region2: #{tpu_custom_call.1} parent=1 // pred_check
      _
    $region3: #{tpu_custom_call.1} parent=1 // pred_check_branch
      %14 = sbr.rel (0) target = $region5
    $region4: #{tpu_custom_call.1} parent=1 // pred_region
      %s16 = ssub.s32 1024, 1024
      %17 = vsyncadd [#allocation3], %s16
      %s18 = sshll.u32 [#allocation2], 4
      %s19 = int_to_ptr.vmem [resolvable:$true] %s18
      %24 = dma.hbm_to_vmem [thread:$0]  %s0, 1024, %s19, [#allocation3], 128, 128, 8
    $region5: #{tpu_custom_call.1} parent=1 // pred_fallthru
      _
    // Predicated region
    $region6: #{tpu_custom_call.1} parent=1 // pred_check
      _
    $region7: #{tpu_custom_call.1} parent=1 // pred_check_branch
      %26 = sbr.rel (0) target = $region9
    $region8: #{tpu_custom_call.1} parent=1 // pred_region
      %s28 = ssub.s32 64, 64
      %29 = vsyncadd [#allocation6], %s28
      %s31 = sshll.u32 [#allocation5], 4
      %s32 = int_to_ptr.vmem [resolvable:$true] %s31
      %34 = dma.hbm_to_vmem [thread:$0]  %s1, 64, %s32, [#allocation6]
    $region9: #{tpu_custom_call.1} parent=1 // pred_fallthru
      _
    // Predicated region
    $region10: #{tpu_custom_call.1} parent=1 // pred_check
      _
    $region11: #{tpu_custom_call.1} parent=1 // pred_check_branch
      %36 = sbr.rel (0) target = $region13
    $region12: #{tpu_custom_call.1} parent=1 // pred_region
      _
    $region13: #{tpu_custom_call.1} parent=1 // pred_fallthru
      _
    // Predicated region
    $region14: #{tpu_custom_call.1} parent=1 // pred_check
      _
    $region15: #{tpu_custom_call.1} parent=1 // pred_check_branch
      %38 = sbr.rel (0) target = $region17
    $region16: #{tpu_custom_call.1} parent=1 // pred_region
      %s40 = ssub.s32 6144, 6144
      %41 = vsyncadd [#allocation6], %s40
      %s42 = sshll.u32 [#allocation7], 4
      %s43 = int_to_ptr.vmem [resolvable:$true] %s42
      %48 = dma.hbm_to_vmem [thread:$0]  %s3, 6144, %s43, [#allocation6], 192, 192, 12
    $region17: #{tpu_custom_call.1} parent=1 // pred_fallthru
      _
    // Predicated region
    $region18: #{tpu_custom_call.1} parent=1 // pred_check
      _
    $region19: #{tpu_custom_call.1} parent=1 // pred_check_branch
      %50 = sbr.rel (0) target = $region21
    $region20: #{tpu_custom_call.1} parent=1 // pred_region
      _
    $region21: #{tpu_custom_call.1} parent=1 // pred_fallthru
      _
    // Predicated region
    $region22: #{tpu_custom_call.1} parent=1 // pred_check
      _
    $region23: #{tpu_custom_call.1} parent=1 // pred_check_branch
      %52 = sbr.rel (0) target = $region25
    $region24: #{tpu_custom_call.1} parent=1 // pred_region
      %53 = dma.done [#allocation3], 1024
    $region25: #{tpu_custom_call.1} parent=1 // pred_fallthru
      _
    // Predicated region
    $region26: #{tpu_custom_call.1} parent=1 // pred_check
      _
    $region27: #{tpu_custom_call.1} parent=1 // pred_check_branch
      %55 = sbr.rel (0) target = $region29
    $region28: #{tpu_custom_call.1} parent=1 // pred_region
      %56 = dma.done [#allocation6], 64
    $region29: #{tpu_custom_call.1} parent=1 // pred_fallthru
      _
    // Predicated region
    $region30: #{tpu_custom_call.1} parent=1 // pred_check
      _
    $region31: #{tpu_custom_call.1} parent=1 // pred_check_branch
      %58 = sbr.rel (0) target = $region33
    $region32: #{tpu_custom_call.1} parent=1 // pred_region
      %59 = dma.done [#allocation6], 6144
    $region33: #{tpu_custom_call.1} parent=1 // pred_fallthru
      _
    %v61 = vld [vmem:[#allocation2] sm:$0xff]
    %v62 = vld [vmem:[#allocation2 + $0x8] sm:$0xff]
    %v63 = vld [vmem:[#allocation2 + $0x10] sm:$0xff]
    %v64 = vld [vmem:[#allocation2 + $0x18] sm:$0xff]
    %v65 = vld [vmem:[#allocation2 + $0x20] sm:$0xff]
    %v66 = vld [vmem:[#allocation2 + $0x28] sm:$0xff]
    %v67 = vld [vmem:[#allocation2 + $0x30] sm:$0xff]
    %v68 = vld [vmem:[#allocation2 + $0x38] sm:$0xff]
    %v77 = vcombine.high %v61, %v61
    %v78 = vcombine.high %v62, %v62
    %v79 = vcombine.high %v63, %v63
    %v80 = vcombine.high %v64, %v64
    %v81 = vcombine.high %v65, %v65
    %v82 = vcombine.high %v66, %v66
    %v83 = vcombine.high %v67, %v67
    %v84 = vcombine.high %v68, %v68
    %vm93 = vcmask 1043456
    %v94 = vsel %vm93, %v61, 0.0
    %v95 = vsel %vm93, %v77, 0.0
    %v96 = vadd.f32 %v94, %v95
    %97 = vadd.xlane.f32.xlu0 %v96
    %v98 = vpop.xlane.xlu0 %97
    %v99 = vsel %vm93, %v62, 0.0
    %v100 = vsel %vm93, %v78, 0.0
    %v101 = vadd.f32 %v99, %v100
    %102 = vadd.xlane.f32.xlu0 %v101
    %v103 = vpop.xlane.xlu0 %102
    %v104 = vsel %vm93, %v63, 0.0
    %v105 = vsel %vm93, %v79, 0.0
    %v106 = vadd.f32 %v104, %v105
    %107 = vadd.xlane.f32.xlu0 %v106
    %v108 = vpop.xlane.xlu0 %107
    %v109 = vsel %vm93, %v64, 0.0
    %v110 = vsel %vm93, %v80, 0.0
    %v111 = vadd.f32 %v109, %v110
    %112 = vadd.xlane.f32.xlu0 %v111
    %v113 = vpop.xlane.xlu0 %112
    %v114 = vsel %vm93, %v65, 0.0
    %v115 = vsel %vm93, %v81, 0.0
    %v116 = vadd.f32 %v114, %v115
    %117 = vadd.xlane.f32.xlu0 %v116
    %v118 = vpop.xlane.xlu0 %117
    %v119 = vsel %vm93, %v66, 0.0
    %v120 = vsel %vm93, %v82, 0.0
    %v121 = vadd.f32 %v119, %v120
    %122 = vadd.xlane.f32.xlu0 %v121
    %v123 = vpop.xlane.xlu0 %122
    %v124 = vsel %vm93, %v67, 0.0
    %v125 = vsel %vm93, %v83, 0.0
    %v126 = vadd.f32 %v124, %v125
    %127 = vadd.xlane.f32.xlu0 %v126
    %v128 = vpop.xlane.xlu0 %127
    %v129 = vsel %vm93, %v68, 0.0
    %v130 = vsel %vm93, %v84, 0.0
    %v131 = vadd.f32 %v129, %v130
    %132 = vadd.xlane.f32.xlu0 %v131
    %v133 = vpop.xlane.xlu0 %132
    %v134 = vpack.c.bf16 %v98, %v98
    %v135 = vpack.c.bf16 %v103, %v103
    %v136 = vpack.c.bf16 %v108, %v108
    %v137 = vpack.c.bf16 %v113, %v113
    %v138 = vpack.c.bf16 %v118, %v118
    %v139 = vpack.c.bf16 %v123, %v123
    %v140 = vpack.c.bf16 %v128, %v128
    %v141 = vpack.c.bf16 %v133, %v133
    %v142 = vld [vmem:[#allocation5] sm:$0xf]
    %v143 = vld [vmem:[%s2] sm:$0x3]
    %v145 = vlaneseq
    %v146 = vshrl.u32 %v145, 7
    %v147 = vsub.s32 0, %v146
    %v148 = vrot.slane %v143, %v147
    %v149 = vlaneseq
    %v150 = vshrl.u32 %v149, 7
    %v151 = vsub.s32 1, %v150
    %v152 = vrot.slane %v143, %v151
    %v163 = vunpack.c.l.b16 %v134
    %v164 = vunpack.c.l.b16 %v135
    %v165 = vunpack.c.l.b16 %v136
    %v166 = vunpack.c.l.b16 %v137
    %v167 = vunpack.c.l.b16 %v138
    %v168 = vunpack.c.l.b16 %v139
    %v169 = vunpack.c.l.b16 %v140
    %v170 = vunpack.c.l.b16 %v141
    %v171 = vlaneseq
    %v172 = vand.u32 %v171, 127
    %v173 = vlaneseq
    %v174 = vshrl.u32 %v173, 7
    %v175 = vsub.s32 %v172, %v174
    %v176 = vrot.slane %v163, %v175
    %v177 = vlaneseq
    %v178 = vshrl.u32 %v177, 7
    %v179 = vsub.s32 %v172, %v178
    %v180 = vrot.slane %v164, %v179
    %v181 = vlaneseq
    %v182 = vshrl.u32 %v181, 7
    %v183 = vsub.s32 %v172, %v182
    %v184 = vrot.slane %v165, %v183
    %v185 = vlaneseq
    %v186 = vshrl.u32 %v185, 7
    %v187 = vsub.s32 %v172, %v186
    %v188 = vrot.slane %v166, %v187
    %v189 = vlaneseq
    %v190 = vshrl.u32 %v189, 7
    %v191 = vsub.s32 %v172, %v190
    %v192 = vrot.slane %v167, %v191
    %v193 = vlaneseq
    %v194 = vshrl.u32 %v193, 7
    %v195 = vsub.s32 %v172, %v194
    %v196 = vrot.slane %v168, %v195
    %v197 = vlaneseq
    %v198 = vshrl.u32 %v197, 7
    %v199 = vsub.s32 %v172, %v198
    %v200 = vrot.slane %v169, %v199
    %v201 = vlaneseq
    %v202 = vshrl.u32 %v201, 7
    %v203 = vsub.s32 %v172, %v202
    %v204 = vrot.slane %v170, %v203
    %vm205 = vcmask 1041409
    %v206 = vsel %vm205, %v180, %v176
    %vm207 = vcmask 1042434
    %v208 = vsel %vm207, %v184, %v206
    %vm209 = vcmask 1043459
    %v210 = vsel %vm209, %v188, %v208
    %vm211 = vcmask 1044484
    %v212 = vsel %vm211, %v192, %v210
    %vm213 = vcmask 1045509
    %v214 = vsel %vm213, %v196, %v212
    %vm215 = vcmask 1046534
    %v216 = vsel %vm215, %v200, %v214
    %vm217 = vcmask 1047559
    %v218 = vsel %vm217, %v204, %v216
    %v219 = vpack.c.b16 %v218, %v218
    %v222 = vunpack.c.l.s4 1983009808
    %v223 = vunpack.c.0.s8 %v222
    %v224 = vlaneseq
    %v225 = vshrl.u32 %v224, 7
    %v226 = vsub.s32 %v223, %v225
    %v227 = vrot.slane %v142, %v226
    %v228 = vcombine.high %v227, %v227
    %vm229 = vcmask 31744
    %v231 = vsel %vm229, %v219, 0
    %vm233 = vcmask 1041408
    %v235 = vsel %vm233, %v227, 0
    %v238 = vsel %vm233, %v228, 0
    %240 = vmatprep.subr.bf16.mxu0 %v238
    %241 = vmatpush1.bf16.msra.mxu0 %v235
    %242 = vmatprep.subr.bf16.mxu0 0
    %243 = vmatpush1.bf16.msra.mxu0 0
    %244 = vmatprep.subr.bf16.mxu0 0
    %245 = vmatpush1.bf16.msra.mxu0 0
    %246 = vmatprep.subr.bf16.mxu0 0
    %247 = vmatpush1.bf16.msra.mxu0 0
    %248 = vmatprep.subr.bf16.mxu0 0
    %249 = vmatpush1.bf16.msra.mxu0 0
    %250 = vmatprep.subr.bf16.mxu0 0
    %251 = vmatpush1.bf16.msra.mxu0 0
    %252 = vmatprep.subr.bf16.mxu0 0
    %253 = vmatpush1.bf16.msra.mxu0 0
    %254 = vmatprep.subr.bf16.mxu0 0
    %255 = vmatpush1.bf16.msra.mxu0 0
    %256 = vmatprep.subr.bf16.mxu0 0
    %257 = vmatpush1.bf16.msra.mxu0 0
    %258 = vmatprep.subr.bf16.mxu0 0
    %259 = vmatpush1.bf16.msra.mxu0 0
    %260 = vmatprep.subr.bf16.mxu0 0
    %261 = vmatpush1.bf16.msra.mxu0 0
    %262 = vmatprep.subr.bf16.mxu0 0
    %263 = vmatpush1.bf16.msra.mxu0 0
    %264 = vmatprep.subr.bf16.mxu0 0
    %265 = vmatpush1.bf16.msra.mxu0 0
    %266 = vmatprep.subr.bf16.mxu0 0
    %267 = vmatpush1.bf16.msra.mxu0 0
    %268 = vmatprep.subr.bf16.mxu0 0
    %269 = vmatpush1.bf16.msra.mxu0 0
    %270 = vmatprep.subr.bf16.mxu0 0
    %271 = vmatpush1.bf16.msra.mxu0 0
    %272 = vmatprep.mubr.bf16.mxu0 0
    %273 = vmatmul.mubr.bf16.gmra.mrb[0].mxu0 %v231
    %v274 = vpop.f32.mrb[0].mxu0
    %v275 = vadd.f32 %v148, %v274
    %v276 = vpop.f32.mrb[0].mxu0
    %v277 = vadd.f32 %v152, %v276
    %v278 = vpop.f32.mrb[0].mxu0
    %v279 = vpop.f32.mrb[0].mxu0
    %280 = vdwg.mxu0
    %v281 = vpack.c.bf16 %v275, %v275
    %v282 = vpack.c.bf16 %v277, %v277
    %v283 = vld [vmem:[#allocation7] sm:$0xff]
    %v284 = vld [vmem:[#allocation7 + $0x8] sm:$0xf]
    %v285 = vld [vmem:[#allocation7 + $0xc] sm:$0xff]
    %v286 = vld [vmem:[#allocation7 + $0x14] sm:$0xf]
    %v287 = vld [vmem:[#allocation7 + $0x18] sm:$0xff]
    %v288 = vld [vmem:[#allocation7 + $0x20] sm:$0xf]
    %v289 = vld [vmem:[#allocation7 + $0x24] sm:$0xff]
    %v290 = vld [vmem:[#allocation7 + $0x2c] sm:$0xf]
    %v291 = vld [vmem:[#allocation7 + $0x30] sm:$0xff]
    %v292 = vld [vmem:[#allocation7 + $0x38] sm:$0xf]
    %v293 = vld [vmem:[#allocation7 + $0x3c] sm:$0xff]
    %v294 = vld [vmem:[#allocation7 + $0x44] sm:$0xf]
    %v295 = vld [vmem:[#allocation7 + $0x48] sm:$0xff]
    %v296 = vld [vmem:[#allocation7 + $0x50] sm:$0xf]
    %v297 = vld [vmem:[#allocation7 + $0x54] sm:$0xff]
    %v298 = vld [vmem:[#allocation7 + $0x5c] sm:$0xf]
    %v299 = vld [vmem:[#allocation7 + $0x60] sm:$0xff]
    %v300 = vld [vmem:[#allocation7 + $0x68] sm:$0xf]
    %v301 = vld [vmem:[#allocation7 + $0x6c] sm:$0xff]
    %v302 = vld [vmem:[#allocation7 + $0x74] sm:$0xf]
    %v303 = vld [vmem:[#allocation7 + $0x78] sm:$0xff]
    %v304 = vld [vmem:[#allocation7 + $0x80] sm:$0xf]
    %v305 = vld [vmem:[#allocation7 + $0x84] sm:$0xff]
    %v306 = vld [vmem:[#allocation7 + $0x8c] sm:$0xf]
    %v307 = vld [vmem:[#allocation7 + $0x90] sm:$0xff]
    %v308 = vld [vmem:[#allocation7 + $0x98] sm:$0xf]
    %v309 = vld [vmem:[#allocation7 + $0x9c] sm:$0xff]
    %v310 = vld [vmem:[#allocation7 + $0xa4] sm:$0xf]
    %v311 = vld [vmem:[#allocation7 + $0xa8] sm:$0xff]
    %v312 = vld [vmem:[#allocation7 + $0xb0] sm:$0xf]
    %v313 = vld [vmem:[#allocation7 + $0xb4] sm:$0xff]
    %v314 = vld [vmem:[#allocation7 + $0xbc] sm:$0xf]
    %v315 = vld [vmem:[#allocation7 + $0xc0] sm:$0xff]
    %v316 = vld [vmem:[#allocation7 + $0xc8] sm:$0xf]
    %v317 = vld [vmem:[#allocation7 + $0xcc] sm:$0xff]
    %v318 = vld [vmem:[#allocation7 + $0xd4] sm:$0xf]
    %v319 = vld [vmem:[#allocation7 + $0xd8] sm:$0xff]
    %v320 = vld [vmem:[#allocation7 + $0xe0] sm:$0xf]
    %v321 = vld [vmem:[#allocation7 + $0xe4] sm:$0xff]
    %v322 = vld [vmem:[#allocation7 + $0xec] sm:$0xf]
    %v323 = vld [vmem:[#allocation7 + $0xf0] sm:$0xff]
    %v324 = vld [vmem:[#allocation7 + $0xf8] sm:$0xf]
    %v325 = vld [vmem:[#allocation7 + $0xfc] sm:$0xff]
    %v326 = vld [vmem:[#allocation7 + $0x104] sm:$0xf]
    %v327 = vld [vmem:[#allocation7 + $0x108] sm:$0xff]
    %v328 = vld [vmem:[#allocation7 + $0x110] sm:$0xf]
    %v329 = vld [vmem:[#allocation7 + $0x114] sm:$0xff]
    %v330 = vld [vmem:[#allocation7 + $0x11c] sm:$0xf]
    %v331 = vld [vmem:[#allocation7 + $0x120] sm:$0xff]
    %v332 = vld [vmem:[#allocation7 + $0x128] sm:$0xf]
    %v333 = vld [vmem:[#allocation7 + $0x12c] sm:$0xff]
    %v334 = vld [vmem:[#allocation7 + $0x134] sm:$0xf]
    %v335 = vld [vmem:[#allocation7 + $0x138] sm:$0xff]
    %v336 = vld [vmem:[#allocation7 + $0x140] sm:$0xf]
    %v337 = vld [vmem:[#allocation7 + $0x144] sm:$0xff]
    %v338 = vld [vmem:[#allocation7 + $0x14c] sm:$0xf]
    %v339 = vld [vmem:[#allocation7 + $0x150] sm:$0xff]
    %v340 = vld [vmem:[#allocation7 + $0x158] sm:$0xf]
    %v341 = vld [vmem:[#allocation7 + $0x15c] sm:$0xff]
    %v342 = vld [vmem:[#allocation7 + $0x164] sm:$0xf]
    %v343 = vld [vmem:[#allocation7 + $0x168] sm:$0xff]
    %v344 = vld [vmem:[#allocation7 + $0x170] sm:$0xf]
    %v345 = vld [vmem:[#allocation7 + $0x174] sm:$0xff]
    %v346 = vld [vmem:[#allocation7 + $0x17c] sm:$0xf]
    %v347 = vld [vmem:[%s4] sm:$0x7]
    %v349 = vlaneseq
    %v350 = vshrl.u32 %v349, 7
    %v351 = vsub.s32 0, %v350
    %v352 = vrot.slane %v347, %v351
    %v353 = vlaneseq
    %v354 = vshrl.u32 %v353, 7
    %v355 = vsub.s32 1, %v354
    %v356 = vrot.slane %v347, %v355
    %v357 = vlaneseq
    %v358 = vshrl.u32 %v357, 7
    %v359 = vsub.s32 2, %v358
    %v360 = vrot.slane %v347, %v359
    %v428 = vunpack.c.l.b16 %v283
    %v429 = vunpack.c.h.b16 %v283
    %v430 = vunpack.c.l.b16 %v284
    %v431 = vunpack.c.l.b16 %v285
    %v432 = vunpack.c.h.b16 %v285
    %v433 = vunpack.c.l.b16 %v286
    %v434 = vunpack.c.l.b16 %v287
    %v435 = vunpack.c.h.b16 %v287
    %v436 = vunpack.c.l.b16 %v288
    %v437 = vunpack.c.l.b16 %v289
    %v438 = vunpack.c.h.b16 %v289
    %v439 = vunpack.c.l.b16 %v290
    %v440 = vunpack.c.l.b16 %v291
    %v441 = vunpack.c.h.b16 %v291
    %v442 = vunpack.c.l.b16 %v292
    %v443 = vunpack.c.l.b16 %v293
    %v444 = vunpack.c.h.b16 %v293
    %v445 = vunpack.c.l.b16 %v294
    %v446 = vunpack.c.l.b16 %v295
    %v447 = vunpack.c.h.b16 %v295
    %v448 = vunpack.c.l.b16 %v296
    %v449 = vunpack.c.l.b16 %v297
    %v450 = vunpack.c.h.b16 %v297
    %v451 = vunpack.c.l.b16 %v298
    %v452 = vunpack.c.l.b16 %v299
    %v453 = vunpack.c.h.b16 %v299
    %v454 = vunpack.c.l.b16 %v300
    %v455 = vunpack.c.l.b16 %v301
    %v456 = vunpack.c.h.b16 %v301
    %v457 = vunpack.c.l.b16 %v302
    %v458 = vunpack.c.l.b16 %v303
    %v459 = vunpack.c.h.b16 %v303
    %v460 = vunpack.c.l.b16 %v304
    %v461 = vunpack.c.l.b16 %v305
    %v462 = vunpack.c.h.b16 %v305
    %v463 = vunpack.c.l.b16 %v306
    %v464 = vunpack.c.l.b16 %v307
    %v465 = vunpack.c.h.b16 %v307
    %v466 = vunpack.c.l.b16 %v308
    %v467 = vunpack.c.l.b16 %v309
    %v468 = vunpack.c.h.b16 %v309
    %v469 = vunpack.c.l.b16 %v310
    %v470 = vunpack.c.l.b16 %v311
    %v471 = vunpack.c.h.b16 %v311
    %v472 = vunpack.c.l.b16 %v312
    %v473 = vunpack.c.l.b16 %v313
    %v474 = vunpack.c.h.b16 %v313
    %v475 = vunpack.c.l.b16 %v314
    %v476 = vunpack.c.l.b16 %v315
    %v477 = vunpack.c.h.b16 %v315
    %v478 = vunpack.c.l.b16 %v316
    %v479 = vunpack.c.l.b16 %v317
    %v480 = vunpack.c.h.b16 %v317
    %v481 = vunpack.c.l.b16 %v318
    %v482 = vunpack.c.l.b16 %v319
    %v483 = vunpack.c.h.b16 %v319
    %v484 = vunpack.c.l.b16 %v320
    %v485 = vunpack.c.l.b16 %v321
    %v486 = vunpack.c.h.b16 %v321
    %v487 = vunpack.c.l.b16 %v322
    %v488 = vunpack.c.l.b16 %v323
    %v489 = vunpack.c.h.b16 %v323
    %v490 = vunpack.c.l.b16 %v324
    %v491 = vunpack.c.l.b16 %v325
    %v492 = vunpack.c.h.b16 %v325
    %v493 = vunpack.c.l.b16 %v326
    %v494 = vunpack.c.l.b16 %v327
    %v495 = vunpack.c.h.b16 %v327
    %v496 = vunpack.c.l.b16 %v328
    %v497 = vunpack.c.l.b16 %v329
    %v498 = vunpack.c.h.b16 %v329
    %v499 = vunpack.c.l.b16 %v330
    %v500 = vunpack.c.l.b16 %v331
    %v501 = vunpack.c.h.b16 %v331
    %v502 = vunpack.c.l.b16 %v332
    %v503 = vunpack.c.l.b16 %v333
    %v504 = vunpack.c.h.b16 %v333
    %v505 = vunpack.c.l.b16 %v334
    %v506 = vunpack.c.l.b16 %v335
    %v507 = vunpack.c.h.b16 %v335
    %v508 = vunpack.c.l.b16 %v336
    %v509 = vunpack.c.l.b16 %v337
    %v510 = vunpack.c.h.b16 %v337
    %v511 = vunpack.c.l.b16 %v338
    %v512 = vunpack.c.l.b16 %v339
    %v513 = vunpack.c.h.b16 %v339
    %v514 = vunpack.c.l.b16 %v340
    %v515 = vunpack.c.l.b16 %v341
    %v516 = vunpack.c.h.b16 %v341
    %v517 = vunpack.c.l.b16 %v342
    %v518 = vunpack.c.l.b16 %v343
    %v519 = vunpack.c.h.b16 %v343
    %v520 = vunpack.c.l.b16 %v344
    %v521 = vunpack.c.l.b16 %v345
    %v522 = vunpack.c.h.b16 %v345
    %v523 = vunpack.c.l.b16 %v346
    %v524 = vpack.c.b16 %v431, %v428
    %v525 = vpack.c.b16 %v432, %v429
    %v526 = vpack.c.b16 %v433, %v430
    %v527 = vpack.c.b16 %v437, %v434
    %v528 = vpack.c.b16 %v438, %v435
    %v529 = vpack.c.b16 %v439, %v436
    %v530 = vpack.c.b16 %v443, %v440
    %v531 = vpack.c.b16 %v444, %v441
    %v532 = vpack.c.b16 %v445, %v442
    %v533 = vpack.c.b16 %v449, %v446
    %v534 = vpack.c.b16 %v450, %v447
    %v535 = vpack.c.b16 %v451, %v448
    %v536 = vpack.c.b16 %v455, %v452
    %v537 = vpack.c.b16 %v456, %v453
    %v538 = vpack.c.b16 %v457, %v454
    %v539 = vpack.c.b16 %v461, %v458
    %v540 = vpack.c.b16 %v462, %v459
    %v541 = vpack.c.b16 %v463, %v460
    %v542 = vpack.c.b16 %v467, %v464
    %v543 = vpack.c.b16 %v468, %v465
    %v544 = vpack.c.b16 %v469, %v466
    %v545 = vpack.c.b16 %v473, %v470
    %v546 = vpack.c.b16 %v474, %v471
    %v547 = vpack.c.b16 %v475, %v472
    %v548 = vpack.c.b16 %v479, %v476
    %v549 = vpack.c.b16 %v480, %v477
    %v550 = vpack.c.b16 %v481, %v478
    %v551 = vpack.c.b16 %v485, %v482
    %v552 = vpack.c.b16 %v486, %v483
    %v553 = vpack.c.b16 %v487, %v484
    %v554 = vpack.c.b16 %v491, %v488
    %v555 = vpack.c.b16 %v492, %v489
    %v556 = vpack.c.b16 %v493, %v490
    %v557 = vpack.c.b16 %v497, %v494
    %v558 = vpack.c.b16 %v498, %v495
    %v559 = vpack.c.b16 %v499, %v496
    %v560 = vpack.c.b16 %v503, %v500
    %v561 = vpack.c.b16 %v504, %v501
    %v562 = vpack.c.b16 %v505, %v502
    %v563 = vpack.c.b16 %v509, %v506
    %v564 = vpack.c.b16 %v510, %v507
    %v565 = vpack.c.b16 %v511, %v508
    %v566 = vpack.c.b16 %v515, %v512
    %v567 = vpack.c.b16 %v516, %v513
    %v568 = vpack.c.b16 %v517, %v514
    %v569 = vpack.c.b16 %v521, %v518
    %v570 = vpack.c.b16 %v522, %v519
    %v571 = vpack.c.b16 %v523, %v520
    %620 = vmatprep.subr.bf16.mxu0 %v525
    %621 = vmatpush1.bf16.msra.mxu0 %v524
    %622 = vmatprep.subr.bf16.mxu0 %v528
    %623 = vmatpush1.bf16.msra.mxu0 %v527
    %624 = vmatprep.subr.bf16.mxu0 %v531
    %625 = vmatpush1.bf16.msra.mxu0 %v530
    %626 = vmatprep.subr.bf16.mxu0 %v534
    %627 = vmatpush1.bf16.msra.mxu0 %v533
    %628 = vmatprep.subr.bf16.mxu0 %v537
    %629 = vmatpush1.bf16.msra.mxu0 %v536
    %630 = vmatprep.subr.bf16.mxu0 %v540
    %631 = vmatpush1.bf16.msra.mxu0 %v539
    %632 = vmatprep.subr.bf16.mxu0 %v543
    %633 = vmatpush1.bf16.msra.mxu0 %v542
    %634 = vmatprep.subr.bf16.mxu0 %v546
    %635 = vmatpush1.bf16.msra.mxu0 %v545
    %636 = vmatprep.subr.bf16.mxu0 %v549
    %637 = vmatpush1.bf16.msra.mxu0 %v548
    %638 = vmatprep.subr.bf16.mxu0 %v552
    %639 = vmatpush1.bf16.msra.mxu0 %v551
    %640 = vmatprep.subr.bf16.mxu0 %v555
    %641 = vmatpush1.bf16.msra.mxu0 %v554
    %642 = vmatprep.subr.bf16.mxu0 %v558
    %643 = vmatpush1.bf16.msra.mxu0 %v557
    %644 = vmatprep.subr.bf16.mxu0 %v561
    %645 = vmatpush1.bf16.msra.mxu0 %v560
    %646 = vmatprep.subr.bf16.mxu0 %v564
    %647 = vmatpush1.bf16.msra.mxu0 %v563
    %648 = vmatprep.subr.bf16.mxu0 %v567
    %649 = vmatpush1.bf16.msra.mxu0 %v566
    %650 = vmatprep.subr.bf16.mxu0 %v570
    %651 = vmatpush1.bf16.msra.mxu0 %v569
    %652 = vmatprep.mubr.bf16.mxu0 %v282
    %653 = vmatmul.mubr.bf16.gmra.mrb[0].mxu0 %v281
    %v654 = vpop.f32.mrb[0].mxu0
    %v655 = vadd.f32 %v352, %v654
    %v656 = vpop.f32.mrb[0].mxu0
    %v657 = vadd.f32 %v356, %v656
    %v658 = vpop.f32.mrb[0].mxu0
    %v659 = vpop.f32.mrb[0].mxu0
    %660 = vdwg.mxu0
    %661 = vmatprep.subr.bf16.mxu0 0
    %662 = vmatpush1.bf16.msra.mxu0 %v526
    %663 = vmatprep.subr.bf16.mxu0 0
    %664 = vmatpush1.bf16.msra.mxu0 %v529
    %665 = vmatprep.subr.bf16.mxu0 0
    %666 = vmatpush1.bf16.msra.mxu0 %v532
    %667 = vmatprep.subr.bf16.mxu0 0
    %668 = vmatpush1.bf16.msra.mxu0 %v535
    %669 = vmatprep.subr.bf16.mxu0 0
    %670 = vmatpush1.bf16.msra.mxu0 %v538
    %671 = vmatprep.subr.bf16.mxu0 0
    %672 = vmatpush1.bf16.msra.mxu0 %v541
    %673 = vmatprep.subr.bf16.mxu0 0
    %674 = vmatpush1.bf16.msra.mxu0 %v544
    %675 = vmatprep.subr.bf16.mxu0 0
    %676 = vmatpush1.bf16.msra.mxu0 %v547
    %677 = vmatprep.subr.bf16.mxu0 0
    %678 = vmatpush1.bf16.msra.mxu0 %v550
    %679 = vmatprep.subr.bf16.mxu0 0
    %680 = vmatpush1.bf16.msra.mxu0 %v553
    %681 = vmatprep.subr.bf16.mxu0 0
    %682 = vmatpush1.bf16.msra.mxu0 %v556
    %683 = vmatprep.subr.bf16.mxu0 0
    %684 = vmatpush1.bf16.msra.mxu0 %v559
    %685 = vmatprep.subr.bf16.mxu0 0
    %686 = vmatpush1.bf16.msra.mxu0 %v562
    %687 = vmatprep.subr.bf16.mxu0 0
    %688 = vmatpush1.bf16.msra.mxu0 %v565
    %689 = vmatprep.subr.bf16.mxu0 0
    %690 = vmatpush1.bf16.msra.mxu0 %v568
    %691 = vmatprep.subr.bf16.mxu0 0
    %692 = vmatpush1.bf16.msra.mxu0 %v571
    %693 = vmatprep.mubr.bf16.mxu0 %v282
    %694 = vmatmul.mubr.bf16.gmra.mrb[0].mxu0 %v281
    %v695 = vpop.f32.mrb[0].mxu0
    %v696 = vadd.f32 %v360, %v695
    %v697 = vpop.f32.mrb[0].mxu0
    %v698 = vpop.f32.mrb[0].mxu0
    %v699 = vpop.f32.mrb[0].mxu0
    %700 = vdwg.mxu0
    %701 = vst [vmem:[#allocation8] sm:$0xff] %v655
    %702 = vst [vmem:[#allocation8 + $0x8] sm:$0xff] %v657
    %703 = vst [vmem:[#allocation8 + $0x10] sm:$0xff] %v696
    // Predicated region
    $region34: #{tpu_custom_call.1} parent=1 // pred_check
      _
    $region35: #{tpu_custom_call.1} parent=1 // pred_check_branch
      %705 = sbr.rel (0) target = $region37
    $region36: #{tpu_custom_call.1} parent=1 // pred_region
      %s707 = ssub.s32 384, 384
      %708 = vsyncadd [#allocation4], %s707
      %s710 = sshll.u32 [#allocation8], 4
      %s711 = int_to_ptr.vmem [resolvable:$true] %s710
      %713 = dma.vmem_to_hbm [thread:$0]  %s711, 384, %s5, [#allocation4]
    $region37: #{tpu_custom_call.1} parent=1 // pred_fallthru
      _
    // Predicated region
    $region38: #{tpu_custom_call.1} parent=1 // pred_check
      _
    $region39: #{tpu_custom_call.1} parent=1 // pred_check_branch
      %715 = sbr.rel (0) target = $region41
    $region40: #{tpu_custom_call.1} parent=1 // pred_region
      %716 = dma.done [#allocation4], 384
    $region41: #{tpu_custom_call.1} parent=1 // pred_fallthru
      _
    %717 = vsyncpa [#allocation3], 1
    %718 = vsyncpa [#allocation6], 1
    %719 = vsyncpa [#allocation4], 1

</llo_original>
